<compile_context>
chip_gen: v6e
topology: v6e:2x2x1
jax: 0.10.0
libtpu: 0.0.40
codegen_flags: <defaults>
</compile_context>

<pallas_src>
import numpy as np

import jax
import jax.numpy as jnp
from jax import lax
from jax.experimental import pallas as pl
from jax.experimental.pallas import tpu as pltpu


# ----------------------------- Pallas kernel ------------------------------- #
def basic_block_d_kernel(x_ref, w1t_ref, w2ms_ref, w2e_ref, b_ref, out_ref):
    """One batch-block of BasicBlock_D, all in lane-dense (rows, W*C) layout.

    x_ref   : (B, H, W*Cin)        bf16  pre-relu input block (unpadded)
    w1t_ref : (3, W*Cin, W*Cm)     bf16  conv1 block-Toeplitz weights, one per ky
    w2ms_ref: (W*Cm + W*Cin, W*Cm) bf16  [conv2 ky=1 Toeplitz ; skip 1x1 blockdiag]
    w2e_ref : (2, W*Cm, W*Cm)      bf16  conv2 ky=0 / ky=2 Toeplitz weights
    b_ref   : (1, W*Cm)            f32   skip bias pre-tiled to the lane layout
    out_ref : (B, H, W*Cm)         f32   lane-dense output block
    """
    B, H, WCi = x_ref.shape
    WCo = out_ref.shape[2]
    f32 = jnp.float32

    x = x_ref[...]                               # bf16, lane-dense
    # relu(x): exact in bf16 (max with 0 never changes the rounding).
    # TODO(synk): on v5e (no bf16 VPU) upcast this relu to f32.
    xr = jnp.maximum(x, 0)

    # ---- conv1: three accumulating MXU dots (ky = 0, 1, 2).  The kx halo is
    # absorbed by the Toeplitz zeros; the ky halo is two zero rows (sublane-dim
    # concat, no lane movement).
    zi = jnp.zeros((B, 1, WCi), x.dtype)
    xrp = jnp.concatenate([zi, xr, zi], axis=1)              # (B, H+2, W*Cin)
    acc1 = jnp.dot(xrp[:, 0:H].reshape(B * H, WCi), w1t_ref[0],
                   preferred_element_type=f32)
    acc1 += jnp.dot(xrp[:, 1:1 + H].reshape(B * H, WCi), w1t_ref[1],
                    preferred_element_type=f32)
    acc1 += jnp.dot(xrp[:, 2:2 + H].reshape(B * H, WCi), w1t_ref[2],
                    preferred_element_type=f32)
    o1 = jnp.maximum(acc1, 0.0).astype(x.dtype).reshape(B, H, WCo)   # relu -> bf16

    # ---- conv2 ky=1 fused with the skip 1x1 conv on the ORIGINAL (pre-relu) x:
    # one dot with K = W*Cm + W*Cin; the residual add folds into the MXU
    # accumulation.  The lane concat is at a 128-aligned boundary (cheap).
    a_mid = jnp.concatenate([o1, x], axis=-1).reshape(B * H, WCo + WCi)
    acc = jnp.dot(a_mid, w2ms_ref[...], preferred_element_type=f32)

    # ---- conv2 ky=0 / ky=2 against the H-padded intermediate.
    zo = jnp.zeros((B, 1, WCo), o1.dtype)
    o1p = jnp.concatenate([zo, o1, zo], axis=1)              # (B, H+2, W*Cm)
    acc += jnp.dot(o1p[:, 0:H].reshape(B * H, WCo), w2e_ref[0],
                   preferred_element_type=f32)
    acc += jnp.dot(o1p[:, 2:2 + H].reshape(B * H, WCo), w2e_ref[1],
                   preferred_element_type=f32)

    # ---- lane-dense store + pre-tiled skip bias: one full-width f32 add.
    out_ref[...] = acc.reshape(B, H, WCo) + b_ref[...]


# --------------------- wrapper-side weight preparation ---------------------- #
# One-time host-side parameter glue (like checkpoint loading); not jitted.
def _toeplitz_conv3x3(w_oihw, W):
    """3x3 conv (stride 1, pad 1, OIHW) -> per-ky block-Toeplitz matmul weights.

    Returns T of shape (3, W*Ci, W*Co) with
        T[ky, wj*Ci + c, w*Co + o] = w[o, c, ky, wj - w + 1]   when |wj - w| <= 1
    so that, in the lane-dense (row, W*C) layout,
        conv_out[h, w*Co + o] = sum_ky  x_rowpadded[h + ky, :] @ T[ky].
    The W-direction (kx) padding is represented by the structural zeros.
    """
    w = np.asarray(w_oihw, np.float32)                   # (Co, Ci, 3, 3)
    Co, Ci = w.shape[0], w.shape[1]
    t = np.zeros((3, W, Ci, W, Co), np.float32)
    for ky in range(3):
        for kx in range(3):
            for wo in range(W):
                wj = wo + kx - 1
                if 0 <= wj < W:
                    t[ky, wj, :, wo, :] = w[:, :, ky, kx].T   # (Ci, Co)
    return jnp.asarray(t.reshape(3, W * Ci, W * Co), dtype=jnp.bfloat16)


def _blockdiag_conv1x1(w_oi, W):
    """1x1 conv weight (Co, Ci) -> block-diagonal (W*Ci, W*Co) matmul weight."""
    w = np.asarray(w_oi, np.float32)
    Co, Ci = w.shape
    t = np.zeros((W, Ci, W, Co), np.float32)
    for wo in range(W):
        t[wo, :, wo, :] = w.T
    return jnp.asarray(t.reshape(W * Ci, W * Co), dtype=jnp.bfloat16)


def _pick_batch_block(n, h):
    """Batch elements stacked per grid step (matmul M = block*H rows).

    Prefers blocks of 4-8 (amortizes MXU fill/drain and ~0.35us/step overhead)
    while leaving an even number of grid steps when N allows, so v7x shards the
    grid across both TensorCores.  At tiny N the whole batch goes in one step.
    """
    cands = [b for b in range(1, n + 1) if n % b == 0 and b <= 8]
    even = [b for b in cands if b >= 4 and (n // b) >= 2 and (n // b) % 2 == 0]
    return max(even) if even else max(cands)


# ------------------------------ wrapper ------------------------------------- #
def basic_block_d_pallas(x_nchw, w1_oihw, w2_oihw, wskip_oihw, bskip,
                         *, batch_block=None):
    """Run BasicBlock_D forward. Inputs are in PyTorch layouts (NCHW / OIHW)."""
    N, Cin, H, W = x_nchw.shape
    Cm = w1_oihw.shape[0]
    WCi, WCo = W * Cin, W * Cm

    if batch_block is None:
        batch_block = _pick_batch_block(N, H)
    assert N % batch_block == 0
    grid = (N // batch_block,)

    # NCHW -> lane-dense (N, H, W*Cin) bf16.  No jnp.pad: the halo is built
    # inside the kernel.  TODO(synk): in a full-network port keep activations
    # lane-dense (NHWC) end-to-end so this boundary transpose disappears too.
    x_ld = (jnp.transpose(x_nchw, (0, 2, 3, 1))
            .reshape(N, H, WCi).astype(jnp.bfloat16))

    w1t = _toeplitz_conv3x3(w1_oihw, W)                       # (3, W*Cin, W*Cm)
    w2t = _toeplitz_conv3x3(w2_oihw, W)                       # (3, W*Cm,  W*Cm)
    wst = _blockdiag_conv1x1(wskip_oihw[:, :, 0, 0], W)       # (W*Cin, W*Cm)
    w2ms = jnp.concatenate([w2t[1], wst], axis=0)             # (W*Cm+W*Cin, W*Cm)
    w2e = jnp.stack([w2t[0], w2t[2]], axis=0)                 # (2, W*Cm, W*Cm)
    # Skip bias pre-tiled to the lane-dense layout: lane = w*Cm + o.
    b_lane = jnp.tile(bskip.astype(jnp.float32), W).reshape(1, WCo)

    # Advisory cost estimate so XLA schedules neighbors around the custom call.
    flops = 2 * N * H * W * Cm * (9 * Cin + 9 * Cm + Cin)
    bytes_accessed = (x_ld.size * 2 + N * H * WCo * 4
                      + (w1t.size + w2ms.size + w2e.size) * 2 + b_lane.size * 4)

    const_wt = dict(pipeline_mode=pl.Buffered(1))   # single-buffer the constants
    grid_spec = pltpu.PrefetchScalarGridSpec(
        num_scalar_prefetch=0,
        grid=grid,
        in_specs=[
            pl.BlockSpec((batch_block, H, WCi), lambda n: (n, 0, 0)),
            pl.BlockSpec((3, WCi, WCo), lambda n: (0, 0, 0), **const_wt),
            pl.BlockSpec((WCo + WCi, WCo), lambda n: (0, 0), **const_wt),
            pl.BlockSpec((2, WCo, WCo), lambda n: (0, 0, 0), **const_wt),
            pl.BlockSpec((1, WCo), lambda n: (0, 0), **const_wt),
        ],
        out_specs=pl.BlockSpec((batch_block, H, WCo), lambda n: (n, 0, 0)),
    )
    out = pl.pallas_call(
        basic_block_d_kernel,
        out_shape=jax.ShapeDtypeStruct((N, H, WCo), jnp.float32),
        grid_spec=grid_spec,
        compiler_params=pltpu.CompilerParams(
            dimension_semantics=("parallel",),
            vmem_limit_bytes=32 * 1024 * 1024),
        cost_estimate=pl.CostEstimate(flops=flops, transcendentals=0,
                                      bytes_accessed=bytes_accessed),
    )(x_ld, w1t, w2ms, w2e, b_lane)

    # lane-dense (N, H, W*Cm) -> NCHW to match the PyTorch output layout.
    return jnp.transpose(out.reshape(N, H, W, Cm), (0, 3, 1, 2))


# ------------------------- parameter setup (glue) --------------------------- #
def _l2normalize(v, eps=1e-12):
    return v / (jnp.linalg.norm(v) + eps)


def spectral_normalize(w_oihw, key, power_iterations=1):
    """Mimic unsup3d SpectralNorm._update_u_v: one power iteration, w / sigma."""
    height = w_oihw.shape[0]
    w_mat = w_oihw.reshape(height, -1)
    u = _l2normalize(jax.random.normal(key, (height,), dtype=jnp.float32))
    v = None
    for _ in range(power_iterations):
        v = _l2normalize(w_mat.T @ u)
        u = _l2normalize(w_mat @ v)
    sigma = u @ (w_mat @ v)
    return w_oihw / sigma


# ------------------------------ references ----------------------------------- #
_DN = ('NCHW', 'OIHW', 'NCHW')


def basic_block_d_ref_f32(x, w1, w2, ws, bs):
    out = jnp.maximum(x, 0.0)
    out = lax.conv_general_dilated(out, w1, (1, 1), ((1, 1), (1, 1)),
                                   dimension_numbers=_DN)
    out = jnp.maximum(out, 0.0)
    out = lax.conv_general_dilated(out, w2, (1, 1), ((1, 1), (1, 1)),
                                   dimension_numbers=_DN)
    resid = lax.conv_general_dilated(x, ws, (1, 1), ((0, 0), (0, 0)),
                                     dimension_numbers=_DN)
    return out + resid + bs[None, :, None, None]


def basic_block_d_ref_bf16(x, w1, w2, ws, bs):
    """Mirrors the kernel: bf16 at conv inputs, f32 accumulation."""
    bf16, f32 = jnp.bfloat16, jnp.float32
    out = jnp.maximum(x, 0.0)
    out = lax.conv_general_dilated(out.astype(bf16), w1.astype(bf16), (1, 1),
                                   ((1, 1), (1, 1)), dimension_numbers=_DN,
                                   preferred_element_type=f32)
    out = jnp.maximum(out, 0.0)
    out = lax.conv_general_dilated(out.astype(bf16), w2.astype(bf16), (1, 1),
                                   ((1, 1), (1, 1)), dimension_numbers=_DN,
                                   preferred_element_type=f32)
    resid = lax.conv_general_dilated(x.astype(bf16), ws.astype(bf16), (1, 1),
                                     ((0, 0), (0, 0)), dimension_numbers=_DN,
                                     preferred_element_type=f32)
    return out + resid + bs[None, :, None, None]


# --------------------------------- main ------------------------------------- #
if __name__ == "__main__":
    N, Cin, Cm, H, W = 2, 4, 8, 16, 16   # inplanes=4, planes=8

    key = jax.random.PRNGKey(0)
    k_x, k_w1, k_w2, k_ws, k_bs, k_u1, k_u2, k_us = jax.random.split(key, 8)

    x = jax.random.normal(k_x, (N, Cin, H, W), dtype=jnp.float32)

    # Deterministic synthetic weights (PyTorch OIHW layout).
    w1_raw = jax.random.normal(k_w1, (Cm, Cin, 3, 3), dtype=jnp.float32) * 0.1
    w2_raw = jax.random.normal(k_w2, (Cm, Cm, 3, 3), dtype=jnp.float32) * 0.1
    wskip = jax.random.normal(k_ws, (Cm, Cin, 1, 1), dtype=jnp.float32) * 0.1
    bskip = jax.random.normal(k_bs, (Cm,), dtype=jnp.float32) * 0.1

    # SpectralNorm wraps conv1 / conv2 / skip conv (weight preprocessing).
    w1 = spectral_normalize(w1_raw, k_u1)
    w2 = spectral_normalize(w2_raw, k_u2)
    wskip_sn = spectral_normalize(wskip, k_us)

    out = basic_block_d_pallas(x, w1, w2, wskip_sn, bskip)
    out = jax.block_until_ready(out)
    assert out.shape == (N, Cm, H, W)

    # Tight check against a reference that matches the kernel's bf16-at-MXU /
    # f32-accumulate numerics, plus a loose sanity check vs the pure-f32 module.
    ref_bf16 = basic_block_d_ref_bf16(x, w1, w2, wskip_sn, bskip)
    ref_f32 = basic_block_d_ref_f32(x, w1, w2, wskip_sn, bskip)
    assert jnp.allclose(out, ref_bf16, atol=1e-2, rtol=1e-2), (
        f"bf16-matched max abs err {jnp.max(jnp.abs(out - ref_bf16))}")
    assert jnp.allclose(out, ref_f32, atol=5e-2, rtol=5e-2), (
        f"f32 max abs err {jnp.max(jnp.abs(out - ref_f32))}")

    print("KERNEL_OK")
</pallas_src>

<mosaic_0001>
module attributes {stable_mosaic.version = 11 : i64} {
  func.func @basic_block_d_kernel(%arg0: i32, %arg1: memref<2x16x64xbf16, #tpu.memory_space<vmem>>, %arg2: memref<3x64x128xbf16, #tpu.memory_space<vmem>>, %arg3: memref<192x128xbf16, #tpu.memory_space<vmem>>, %arg4: memref<2x128x128xbf16, #tpu.memory_space<vmem>>, %arg5: memref<1x128xf32, #tpu.memory_space<vmem>>, %arg6: memref<2x16x128xf32, #tpu.memory_space<vmem>>) attributes {dimension_semantics = [#tpu.dimension_semantics<parallel>], iteration_bounds = array<i64: 1>, scalar_prefetch = 0 : i64, scratch_operands = 0 : i64, tpu.core_type = #tpu.core_type<tc>, window_params = [{transform_indices = @transform_0, window_bounds = array<i64: 2, 16, 64>}, {pipeline_mode = #tpu.pipeline_mode<synchronous>, transform_indices = @transform_1, window_bounds = array<i64: 3, 64, 128>}, {pipeline_mode = #tpu.pipeline_mode<synchronous>, transform_indices = @transform_2, window_bounds = array<i64: 192, 128>}, {pipeline_mode = #tpu.pipeline_mode<synchronous>, transform_indices = @transform_3, window_bounds = array<i64: 2, 128, 128>}, {pipeline_mode = #tpu.pipeline_mode<synchronous>, transform_indices = @transform_4, window_bounds = array<i64: 1, 128>}, {transform_indices = @transform_5, window_bounds = array<i64: 2, 16, 128>}]} {
    %c0 = arith.constant 0 : index
    %c0_0 = arith.constant 0 : index
    %c0_1 = arith.constant 0 : index
    %0 = vector.load %arg1[%c0, %c0_0, %c0_1] : memref<2x16x64xbf16, #tpu.memory_space<vmem>>, vector<2x16x64xbf16>
    %cst = arith.constant 0.000000e+00 : bf16
    %1 = vector.broadcast %cst : bf16 to vector<2x16x64xbf16>
    %2 = arith.maximumf %0, %1 : vector<2x16x64xbf16>
    %cst_2 = arith.constant 0.000000e+00 : bf16
    %3 = vector.broadcast %cst_2 : bf16 to vector<2x1x64xbf16>
    %4 = tpu.concatenate %3, %2, %3 in 1 : vector<2x1x64xbf16>, vector<2x16x64xbf16>, vector<2x1x64xbf16> -> vector<2x18x64xbf16>
    %5 = vector.extract_strided_slice %4 {offsets = [0, 0, 0], sizes = [2, 16, 64], strides = [1, 1, 1]} : vector<2x18x64xbf16> to vector<2x16x64xbf16>
    %6 = vector.shape_cast %5 : vector<2x16x64xbf16> to vector<32x64xbf16>
    %c0_3 = arith.constant 0 : index
    %c0_4 = arith.constant 0 : index
    %c0_5 = arith.constant 0 : index
    %7 = vector.load %arg2[%c0_3, %c0_4, %c0_5] : memref<3x64x128xbf16, #tpu.memory_space<vmem>>, vector<1x64x128xbf16>
    %8 = vector.shape_cast %7 : vector<1x64x128xbf16> to vector<64x128xbf16>
    %cst_6 = arith.constant dense<0.000000e+00> : vector<32x128xf32>
    %9 = tpu.matmul %6, %8, %cst_6 {dimension_numbers = #tpu.dot_dimension_numbers<[1], [0], [0], [1], [0, 0, 1, 1], [], []>} : vector<32x64xbf16>, vector<64x128xbf16>, vector<32x128xf32> -> vector<32x128xf32>
    %10 = vector.extract_strided_slice %4 {offsets = [0, 1, 0], sizes = [2, 16, 64], strides = [1, 1, 1]} : vector<2x18x64xbf16> to vector<2x16x64xbf16>
    %11 = vector.shape_cast %10 : vector<2x16x64xbf16> to vector<32x64xbf16>
    %c1 = arith.constant 1 : index
    %c0_7 = arith.constant 0 : index
    %c0_8 = arith.constant 0 : index
    %12 = vector.load %arg2[%c1, %c0_7, %c0_8] : memref<3x64x128xbf16, #tpu.memory_space<vmem>>, vector<1x64x128xbf16>
    %13 = vector.shape_cast %12 : vector<1x64x128xbf16> to vector<64x128xbf16>
    %cst_9 = arith.constant dense<0.000000e+00> : vector<32x128xf32>
    %14 = tpu.matmul %11, %13, %cst_9 {dimension_numbers = #tpu.dot_dimension_numbers<[1], [0], [0], [1], [0, 0, 1, 1], [], []>} : vector<32x64xbf16>, vector<64x128xbf16>, vector<32x128xf32> -> vector<32x128xf32>
    %15 = arith.addf %9, %14 : vector<32x128xf32>
    %16 = vector.extract_strided_slice %4 {offsets = [0, 2, 0], sizes = [2, 16, 64], strides = [1, 1, 1]} : vector<2x18x64xbf16> to vector<2x16x64xbf16>
    %17 = vector.shape_cast %16 : vector<2x16x64xbf16> to vector<32x64xbf16>
    %c2 = arith.constant 2 : index
    %c0_10 = arith.constant 0 : index
    %c0_11 = arith.constant 0 : index
    %18 = vector.load %arg2[%c2, %c0_10, %c0_11] : memref<3x64x128xbf16, #tpu.memory_space<vmem>>, vector<1x64x128xbf16>
    %19 = vector.shape_cast %18 : vector<1x64x128xbf16> to vector<64x128xbf16>
    %cst_12 = arith.constant dense<0.000000e+00> : vector<32x128xf32>
    %20 = tpu.matmul %17, %19, %cst_12 {dimension_numbers = #tpu.dot_dimension_numbers<[1], [0], [0], [1], [0, 0, 1, 1], [], []>} : vector<32x64xbf16>, vector<64x128xbf16>, vector<32x128xf32> -> vector<32x128xf32>
    %21 = arith.addf %15, %20 : vector<32x128xf32>
    %cst_13 = arith.constant 0.000000e+00 : f32
    %22 = vector.broadcast %cst_13 : f32 to vector<32x128xf32>
    %23 = arith.maximumf %21, %22 : vector<32x128xf32>
    %24 = arith.truncf %23 : vector<32x128xf32> to vector<32x128xbf16>
    %25 = vector.shape_cast %24 : vector<32x128xbf16> to vector<2x16x128xbf16>
    %26 = tpu.concatenate %25, %0 in 2 : vector<2x16x128xbf16>, vector<2x16x64xbf16> -> vector<2x16x192xbf16>
    %27 = vector.shape_cast %26 : vector<2x16x192xbf16> to vector<32x192xbf16>
    %c0_14 = arith.constant 0 : index
    %c0_15 = arith.constant 0 : index
    %28 = vector.load %arg3[%c0_14, %c0_15] : memref<192x128xbf16, #tpu.memory_space<vmem>>, vector<192x128xbf16>
    %cst_16 = arith.constant dense<0.000000e+00> : vector<32x128xf32>
    %29 = tpu.matmul %27, %28, %cst_16 {dimension_numbers = #tpu.dot_dimension_numbers<[1], [0], [0], [1], [0, 0, 1, 1], [], []>} : vector<32x192xbf16>, vector<192x128xbf16>, vector<32x128xf32> -> vector<32x128xf32>
    %cst_17 = arith.constant 0.000000e+00 : bf16
    %30 = vector.broadcast %cst_17 : bf16 to vector<2x1x128xbf16>
    %31 = tpu.concatenate %30, %25, %30 in 1 : vector<2x1x128xbf16>, vector<2x16x128xbf16>, vector<2x1x128xbf16> -> vector<2x18x128xbf16>
    %32 = vector.extract_strided_slice %31 {offsets = [0, 0, 0], sizes = [2, 16, 128], strides = [1, 1, 1]} : vector<2x18x128xbf16> to vector<2x16x128xbf16>
    %33 = vector.shape_cast %32 : vector<2x16x128xbf16> to vector<32x128xbf16>
    %c0_18 = arith.constant 0 : index
    %c0_19 = arith.constant 0 : index
    %c0_20 = arith.constant 0 : index
    %34 = vector.load %arg4[%c0_18, %c0_19, %c0_20] : memref<2x128x128xbf16, #tpu.memory_space<vmem>>, vector<1x128x128xbf16>
    %35 = vector.shape_cast %34 : vector<1x128x128xbf16> to vector<128x128xbf16>
    %cst_21 = arith.constant dense<0.000000e+00> : vector<32x128xf32>
    %36 = tpu.matmul %33, %35, %cst_21 {dimension_numbers = #tpu.dot_dimension_numbers<[1], [0], [0], [1], [0, 0, 1, 1], [], []>} : vector<32x128xbf16>, vector<128x128xbf16>, vector<32x128xf32> -> vector<32x128xf32>
    %37 = arith.addf %29, %36 : vector<32x128xf32>
    %38 = vector.extract_strided_slice %31 {offsets = [0, 2, 0], sizes = [2, 16, 128], strides = [1, 1, 1]} : vector<2x18x128xbf16> to vector<2x16x128xbf16>
    %39 = vector.shape_cast %38 : vector<2x16x128xbf16> to vector<32x128xbf16>
    %c1_22 = arith.constant 1 : index
    %c0_23 = arith.constant 0 : index
    %c0_24 = arith.constant 0 : index
    %40 = vector.load %arg4[%c1_22, %c0_23, %c0_24] : memref<2x128x128xbf16, #tpu.memory_space<vmem>>, vector<1x128x128xbf16>
    %41 = vector.shape_cast %40 : vector<1x128x128xbf16> to vector<128x128xbf16>
    %cst_25 = arith.constant dense<0.000000e+00> : vector<32x128xf32>
    %42 = tpu.matmul %39, %41, %cst_25 {dimension_numbers = #tpu.dot_dimension_numbers<[1], [0], [0], [1], [0, 0, 1, 1], [], []>} : vector<32x128xbf16>, vector<128x128xbf16>, vector<32x128xf32> -> vector<32x128xf32>
    %43 = arith.addf %37, %42 : vector<32x128xf32>
    %44 = vector.shape_cast %43 : vector<32x128xf32> to vector<2x16x128xf32>
    %c0_26 = arith.constant 0 : index
    %c0_27 = arith.constant 0 : index
    %45 = vector.load %arg5[%c0_26, %c0_27] : memref<1x128xf32, #tpu.memory_space<vmem>>, vector<1x128xf32>
    %46 = vector.shape_cast %45 : vector<1x128xf32> to vector<1x1x128xf32>
    %47 = vector.broadcast %46 : vector<1x1x128xf32> to vector<2x16x128xf32>
    %48 = arith.addf %44, %47 : vector<2x16x128xf32>
    %c0_28 = arith.constant 0 : index
    %c0_29 = arith.constant 0 : index
    %c0_30 = arith.constant 0 : index
    %49 = vector.load %arg6[%c0_28, %c0_29, %c0_30] : memref<2x16x128xf32, #tpu.memory_space<vmem>>, vector<2x16x128xf32>
    tpu.vector_store %arg6[%c0_28, %c0_29, %c0_30], %48 {strides = array<i32>} : memref<2x16x128xf32, #tpu.memory_space<vmem>>, vector<2x16x128xf32>,
    return
  }
  func.func @transform_0(%arg0: i32) -> (i32, i32, i32) {
    %c0_i32 = arith.constant 0 : i32
    %c0_i32_0 = arith.constant 0 : i32
    %c0_i32_1 = arith.constant 0 : i32
    return %arg0, %c0_i32, %c0_i32_0 : i32, i32, i32
  }
  func.func @transform_1(%arg0: i32) -> (i32, i32, i32) {
    %c0_i32 = arith.constant 0 : i32
    %c0_i32_0 = arith.constant 0 : i32
    %c0_i32_1 = arith.constant 0 : i32
    %c0_i32_2 = arith.constant 0 : i32
    return %c0_i32, %c0_i32_0, %c0_i32_1 : i32, i32, i32
  }
  func.func @transform_2(%arg0: i32) -> (i32, i32) {
    %c0_i32 = arith.constant 0 : i32
    %c0_i32_0 = arith.constant 0 : i32
    %c0_i32_1 = arith.constant 0 : i32
    return %c0_i32, %c0_i32_0 : i32, i32
  }
  func.func @transform_3(%arg0: i32) -> (i32, i32, i32) {
    %c0_i32 = arith.constant 0 : i32
    %c0_i32_0 = arith.constant 0 : i32
    %c0_i32_1 = arith.constant 0 : i32
    %c0_i32_2 = arith.constant 0 : i32
    return %c0_i32, %c0_i32_0, %c0_i32_1 : i32, i32, i32
  }
  func.func @transform_4(%arg0: i32) -> (i32, i32) {
    %c0_i32 = arith.constant 0 : i32
    %c0_i32_0 = arith.constant 0 : i32
    %c0_i32_1 = arith.constant 0 : i32
    return %c0_i32, %c0_i32_0 : i32, i32
  }
  func.func @transform_5(%arg0: i32) -> (i32, i32, i32) {
    %c0_i32 = arith.constant 0 : i32
    %c0_i32_0 = arith.constant 0 : i32
    %c0_i32_1 = arith.constant 0 : i32
    return %arg0, %c0_i32, %c0_i32_0 : i32, i32, i32
  }
}

</mosaic_0001>

<llo_original>
// kernel: tpu_custom_call.1
$region0: #{tpu_custom_call.1}
  #allocation0 [shape = 'u32[]', space=smem, size = 0x4, offset = 0x4, fixed_abs, tag = 'smem constant byte address 0x4 - core index']
  #allocation1 [shape = 'u32[144,128]{1,0:T(1,128)}', space=vmem, size = 0x12000, scoped, tag = 'internal scratch']
  %s0 = inlined_call_operand.hbm [shape: bf16[2,16,64], index: 0, kind: input, shape index: {}]
  %s1 = inlined_call_operand.hbm [shape: bf16[3,64,128], index: 1, kind: input, shape index: {}]
  %s2 = inlined_call_operand.hbm [shape: bf16[192,128], index: 2, kind: input, shape index: {}]
  %s3 = inlined_call_operand.hbm [shape: bf16[2,128,128], index: 3, kind: input, shape index: {}]
  %s4 = inlined_call_operand.vmem [shape: f32[1,128], index: 4, kind: input, shape index: {}]
  %s5 = inlined_call_operand.hbm [shape: f32[2,16,128], index: 5, kind: output, shape index: {}]
  %s6 = sld [smem:[#allocation0]]
  $region46: #{tpu_custom_call.1} parent=0
    _
  %s8 = ssub.s32 1, %s6
  %s9 = scalar_select 0, %s8, %s6
  $region1: #{tpu_custom_call.1} parent=0
    #allocation2 [shape = 'u8[8192]{0}', space=vmem, size = 0x2000, scoped, tag = 'input window, operand 0, single buffered']
    #allocation3 [shape = 's32[1]{0}', space=sflag, size = 0x4, scoped, tag = 'scoped memory for tpu_custom_call.1']
    #allocation4 [shape = 's32[1]{0}', space=sflag, size = 0x4, scoped, tag = 'scoped memory for tpu_custom_call.1']
    #allocation5 [shape = 'u8[49152]{0}', space=vmem, size = 0xc000, scoped, tag = 'input window, operand 1, single buffered']
    #allocation6 [shape = 's32[1]{0}', space=sflag, size = 0x4, scoped, tag = 'scoped memory for tpu_custom_call.1']
    #allocation7 [shape = 'u8[49152]{0}', space=vmem, size = 0xc000, scoped, tag = 'input window, operand 2, single buffered']
    #allocation8 [shape = 'u8[65536]{0}', space=vmem, size = 0x10000, scoped, tag = 'input window, operand 3, single buffered']
    #allocation9 [shape = 's32[1]{0}', space=sflag, size = 0x4, scoped, tag = 'scoped memory for tpu_custom_call.1']
    #allocation10 [shape = 'u8[16384]{0}', space=vmem, size = 0x4000, scoped, tag = 'output window, operand 0, single buffered']
    %10 = vsyncpa [#allocation3], 0
    %11 = vsyncpa [#allocation6], 0
    %12 = vsyncpa [#allocation9], 0
    %13 = vsyncpa [#allocation4], 0
    // Predicated region
    $region2: #{tpu_custom_call.1} parent=1 // pred_check
      _
    $region3: #{tpu_custom_call.1} parent=1 // pred_check_branch
      %15 = sbr.rel (0) target = $region5
    $region4: #{tpu_custom_call.1} parent=1 // pred_region
      %s17 = ssub.s32 256, 256
      %18 = vsyncadd [#allocation3], %s17
      %s19 = sshll.u32 [#allocation2], 4
      %s20 = int_to_ptr.vmem [resolvable:$true] %s19
      %25 = dma.hbm_to_vmem [thread:$0]  %s0, 256, %s20, [#allocation3], 64, 64, 4
    $region5: #{tpu_custom_call.1} parent=1 // pred_fallthru
      _
    // Predicated region
    $region6: #{tpu_custom_call.1} parent=1 // pred_check
      _
    $region7: #{tpu_custom_call.1} parent=1 // pred_check_branch
      %27 = sbr.rel (0) target = $region9
    $region8: #{tpu_custom_call.1} parent=1 // pred_region
      %s29 = ssub.s32 1536, 1536
      %30 = vsyncadd [#allocation6], %s29
      %s31 = sshll.u32 [#allocation5], 4
      %s32 = int_to_ptr.vmem [resolvable:$true] %s31
      %37 = dma.hbm_to_vmem [thread:$0]  %s1, 1536, %s32, [#allocation6], 64, 64, 4
    $region9: #{tpu_custom_call.1} parent=1 // pred_fallthru
      _
    // Predicated region
    $region10: #{tpu_custom_call.1} parent=1 // pred_check
      _
    $region11: #{tpu_custom_call.1} parent=1 // pred_check_branch
      %39 = sbr.rel (0) target = $region13
    $region12: #{tpu_custom_call.1} parent=1 // pred_region
      %s41 = ssub.s32 1536, 1536
      %42 = vsyncadd [#allocation6], %s41
      %s43 = sshll.u32 [#allocation7], 4
      %s44 = int_to_ptr.vmem [resolvable:$true] %s43
      %49 = dma.hbm_to_vmem [thread:$0]  %s2, 1536, %s44, [#allocation6], 64, 64, 4
    $region13: #{tpu_custom_call.1} parent=1 // pred_fallthru
      _
    // Predicated region
    $region14: #{tpu_custom_call.1} parent=1 // pred_check
      _
    $region15: #{tpu_custom_call.1} parent=1 // pred_check_branch
      %51 = sbr.rel (0) target = $region17
    $region16: #{tpu_custom_call.1} parent=1 // pred_region
      %s53 = ssub.s32 2048, 2048
      %54 = vsyncadd [#allocation9], %s53
      %s55 = sshll.u32 [#allocation8], 4
      %s56 = int_to_ptr.vmem [resolvable:$true] %s55
      %61 = dma.hbm_to_vmem [thread:$0]  %s3, 2048, %s56, [#allocation9], 64, 64, 4
    $region17: #{tpu_custom_call.1} parent=1 // pred_fallthru
      _
    // Predicated region
    $region18: #{tpu_custom_call.1} parent=1 // pred_check
      _
    $region19: #{tpu_custom_call.1} parent=1 // pred_check_branch
      %63 = sbr.rel (0) target = $region21
    $region20: #{tpu_custom_call.1} parent=1 // pred_region
      _
    $region21: #{tpu_custom_call.1} parent=1 // pred_fallthru
      _
    // Predicated region
    $region22: #{tpu_custom_call.1} parent=1 // pred_check
      _
    $region23: #{tpu_custom_call.1} parent=1 // pred_check_branch
      %65 = sbr.rel (0) target = $region25
    $region24: #{tpu_custom_call.1} parent=1 // pred_region
      %66 = dma.done [#allocation3], 256
    $region25: #{tpu_custom_call.1} parent=1 // pred_fallthru
      _
    // Predicated region
    $region26: #{tpu_custom_call.1} parent=1 // pred_check
      _
    $region27: #{tpu_custom_call.1} parent=1 // pred_check_branch
      %68 = sbr.rel (0) target = $region29
    $region28: #{tpu_custom_call.1} parent=1 // pred_region
      %69 = dma.done [#allocation6], 1536
    $region29: #{tpu_custom_call.1} parent=1 // pred_fallthru
      _
    // Predicated region
    $region30: #{tpu_custom_call.1} parent=1 // pred_check
      _
    $region31: #{tpu_custom_call.1} parent=1 // pred_check_branch
      %71 = sbr.rel (0) target = $region33
    $region32: #{tpu_custom_call.1} parent=1 // pred_region
      %72 = dma.done [#allocation6], 1536
    $region33: #{tpu_custom_call.1} parent=1 // pred_fallthru
      _
    // Predicated region
    $region34: #{tpu_custom_call.1} parent=1 // pred_check
      _
    $region35: #{tpu_custom_call.1} parent=1 // pred_check_branch
      %74 = sbr.rel (0) target = $region37
    $region36: #{tpu_custom_call.1} parent=1 // pred_region
      %75 = dma.done [#allocation9], 2048
    $region37: #{tpu_custom_call.1} parent=1 // pred_fallthru
      _
    %v77 = vld [vmem:[#allocation2] sm:$0xf]
    %v78 = vld [vmem:[#allocation2 + $0x4] sm:$0xf]
    %v79 = vld [vmem:[#allocation2 + $0x8] sm:$0xf]
    %v80 = vld [vmem:[#allocation2 + $0xc] sm:$0xf]
    %v81 = vmax.bf16 %v77, 0
    %v82 = vmax.bf16 %v78, 0
    %v83 = vmax.bf16 %v79, 0
    %v84 = vmax.bf16 %v80, 0
    %v89 = vunpack.c.l.b16 %v81
    %v90 = vunpack.c.l.b16 %v82
    %v91 = vunpack.c.l.b16 %v83
    %v92 = vunpack.c.l.b16 %v84
    %v93 = vpack.c.b16 %v90, %v89
    %v94 = vpack.c.b16 %v92, %v91
    %v96 = vshrl.u32 %v93, 16
    %v98 = vrot.slane %v96, 7
    %v99 = vshll.u32 %v93, 16
    %v101 = vor.u32 %v98, %v99
    %v103 = vshrl.u32 %v94, 16
    %v105 = vrot.slane %v103, 7
    %v106 = vshll.u32 %v94, 16
    %v108 = vor.u32 %v105, %v106
    %vm113 = vcmask 1040384
    %vm114 = vsmask.f32 256
    %vm115 = vmand %vm113, %vm114
    %v116 = vsel %vm115, 0, %v101
    %v117 = vsel %vm115, 0, %v108
    %v118 = vsel %vm115, %v98, 0
    %v119 = vsel %vm115, %v105, 0
    %v120 = vld [vmem:[#allocation5] sm:$0xf]
    %v121 = vld [vmem:[#allocation5 + $0x4] sm:$0xf]
    %v122 = vld [vmem:[#allocation5 + $0x8] sm:$0xf]
    %v123 = vld [vmem:[#allocation5 + $0xc] sm:$0xf]
    %v124 = vld [vmem:[#allocation5 + $0x10] sm:$0xf]
    %v125 = vld [vmem:[#allocation5 + $0x14] sm:$0xf]
    %v126 = vld [vmem:[#allocation5 + $0x18] sm:$0xf]
    %v127 = vld [vmem:[#allocation5 + $0x1c] sm:$0xf]
    %vm128 = vsmask.f32 7424
    %v130 = vshrl.u32 %v116, 16
    %v132 = vshll.u32 %v116, 16
    %v134 = vrot.slane %v132, 1
    %v135 = vor.u32 %v130, %v134
    %v137 = vshll.u32 %v118, 16
    %v139 = vrot.slane %v137, 1
    %v140 = vsel %vm128, %v135, %v139
    %v142 = vshrl.u32 %v117, 16
    %v144 = vshll.u32 %v117, 16
    %v146 = vrot.slane %v144, 1
    %v147 = vor.u32 %v142, %v146
    %v149 = vshll.u32 %v119, 16
    %v151 = vrot.slane %v149, 1
    %v152 = vsel %vm128, %v147, %v151
    %s153 = scalar_lea.vmem [#allocation5], 32
    %v154 = vld [vmem:[%s153] sm:$0xf]
    %v155 = vld [vmem:[%s153 + $0x4] sm:$0xf]
    %v156 = vld [vmem:[%s153 + $0x8] sm:$0xf]
    %v157 = vld [vmem:[%s153 + $0xc] sm:$0xf]
    %v158 = vld [vmem:[%s153 + $0x10] sm:$0xf]
    %v159 = vld [vmem:[%s153 + $0x14] sm:$0xf]
    %v160 = vld [vmem:[%s153 + $0x18] sm:$0xf]
    %v161 = vld [vmem:[%s153 + $0x1c] sm:$0xf]
    %v170 = vunpack.c.l.b16 %v154
    %v171 = vunpack.c.l.b16 %v155
    %v172 = vunpack.c.l.b16 %v156
    %v173 = vunpack.c.l.b16 %v157
    %v174 = vunpack.c.l.b16 %v158
    %v175 = vunpack.c.l.b16 %v159
    %v176 = vunpack.c.l.b16 %v160
    %v177 = vunpack.c.l.b16 %v161
    %v178 = vpack.c.b16 %v171, %v170
    %v179 = vpack.c.b16 %v173, %v172
    %v180 = vpack.c.b16 %v175, %v174
    %v181 = vpack.c.b16 %v177, %v176
    %vm186 = vcmask 523264
    %v188 = vsel %vm186, %v140, 0
    %v191 = vsel %vm186, %v152, 0
    %193 = vmatprep.subr.bf16.mxu0 0
    %194 = vmatpush1.bf16.msra.mxu0 0
    %195 = vmatprep.subr.bf16.mxu0 0
    %196 = vmatpush1.bf16.msra.mxu0 0
    %197 = vmatprep.subr.bf16.mxu0 0
    %198 = vmatpush1.bf16.msra.mxu0 0
    %199 = vmatprep.subr.bf16.mxu0 0
    %200 = vmatpush1.bf16.msra.mxu0 0
    %201 = vmatprep.subr.bf16.mxu0 0
    %202 = vmatpush1.bf16.msra.mxu0 %v181
    %203 = vmatprep.subr.bf16.mxu0 0
    %204 = vmatpush1.bf16.msra.mxu0 %v180
    %205 = vmatprep.subr.bf16.mxu0 0
    %206 = vmatpush1.bf16.msra.mxu0 %v179
    %207 = vmatprep.subr.bf16.mxu0 0
    %208 = vmatpush1.bf16.msra.mxu0 %v178
    %209 = vmatprep.subr.bf16.mxu0 0
    %210 = vmatpush2.bf16.msra.mxu0 0
    %211 = vmatprep.subr.bf16.mxu0 0
    %212 = vmatpush2.bf16.msra.mxu0 0
    %213 = vmatprep.subr.bf16.mxu0 0
    %214 = vmatpush2.bf16.msra.mxu0 0
    %215 = vmatprep.subr.bf16.mxu0 0
    %216 = vmatpush2.bf16.msra.mxu0 0
    %217 = vmatprep.subr.bf16.mxu0 0
    %218 = vmatpush2.bf16.msra.mxu0 0
    %219 = vmatprep.subr.bf16.mxu0 0
    %220 = vmatpush2.bf16.msra.mxu0 0
    %221 = vmatprep.subr.bf16.mxu0 0
    %222 = vmatpush2.bf16.msra.mxu0 0
    %223 = vmatprep.subr.bf16.mxu0 0
    %224 = vmatpush2.bf16.msra.mxu0 0
    %225 = vmatprep.mubr.bf16.mxu0 0
    %226 = vmatmul.mubr.bf16.gmra.mxu0 %v188
    %v227 = vpop.f32.mrf.mxu0
    %v228 = vadd.f32 0.0, %v227
    %v229 = vpop.f32.mrf.mxu0
    %v230 = vpop.f32.mrf.mxu0
    %v231 = vadd.f32 0.0, %v230
    %v232 = vpop.f32.mrf.mxu0
    %233 = vmatprep.mubr.bf16.mxu0 0
    %234 = vmatmul.mubr.bf16.gmra.mxu0 %v191
    %v235 = vpop.f32.mrf.mxu0
    %v236 = vadd.f32 0.0, %v235
    %v237 = vpop.f32.mrf.mxu0
    %v238 = vpop.f32.mrf.mxu0
    %v239 = vadd.f32 0.0, %v238
    %v240 = vpop.f32.mrf.mxu0
    %241 = vdwg.mxu0
    %v250 = vunpack.c.l.b16 %v120
    %v251 = vunpack.c.l.b16 %v121
    %v252 = vunpack.c.l.b16 %v122
    %v253 = vunpack.c.l.b16 %v123
    %v254 = vunpack.c.l.b16 %v124
    %v255 = vunpack.c.l.b16 %v125
    %v256 = vunpack.c.l.b16 %v126
    %v257 = vunpack.c.l.b16 %v127
    %v258 = vpack.c.b16 %v251, %v250
    %v259 = vpack.c.b16 %v253, %v252
    %v260 = vpack.c.b16 %v255, %v254
    %v261 = vpack.c.b16 %v257, %v256
    %v266 = vsel %vm186, %v116, 0
    %v268 = vsel %vm186, %v117, 0
    %270 = vmatprep.subr.bf16.mxu0 0
    %271 = vmatpush1.bf16.msra.mxu0 0
    %272 = vmatprep.subr.bf16.mxu0 0
    %273 = vmatpush1.bf16.msra.mxu0 0
    %274 = vmatprep.subr.bf16.mxu0 0
    %275 = vmatpush1.bf16.msra.mxu0 0
    %276 = vmatprep.subr.bf16.mxu0 0
    %277 = vmatpush1.bf16.msra.mxu0 0
    %278 = vmatprep.subr.bf16.mxu0 0
    %279 = vmatpush1.bf16.msra.mxu0 %v261
    %280 = vmatprep.subr.bf16.mxu0 0
    %281 = vmatpush1.bf16.msra.mxu0 %v260
    %282 = vmatprep.subr.bf16.mxu0 0
    %283 = vmatpush1.bf16.msra.mxu0 %v259
    %284 = vmatprep.subr.bf16.mxu0 0
    %285 = vmatpush1.bf16.msra.mxu0 %v258
    %286 = vmatprep.subr.bf16.mxu0 0
    %287 = vmatpush2.bf16.msra.mxu0 0
    %288 = vmatprep.subr.bf16.mxu0 0
    %289 = vmatpush2.bf16.msra.mxu0 0
    %290 = vmatprep.subr.bf16.mxu0 0
    %291 = vmatpush2.bf16.msra.mxu0 0
    %292 = vmatprep.subr.bf16.mxu0 0
    %293 = vmatpush2.bf16.msra.mxu0 0
    %294 = vmatprep.subr.bf16.mxu0 0
    %295 = vmatpush2.bf16.msra.mxu0 0
    %296 = vmatprep.subr.bf16.mxu0 0
    %297 = vmatpush2.bf16.msra.mxu0 0
    %298 = vmatprep.subr.bf16.mxu0 0
    %299 = vmatpush2.bf16.msra.mxu0 0
    %300 = vmatprep.subr.bf16.mxu0 0
    %301 = vmatpush2.bf16.msra.mxu0 0
    %302 = vmatprep.mubr.bf16.mxu0 0
    %303 = vmatmul.mubr.bf16.gmra.mxu0 %v266
    %v304 = vpop.f32.mrf.mxu0
    %v305 = vadd.f32 %v228, %v304
    %v306 = vpop.f32.mrf.mxu0
    %v307 = vpop.f32.mrf.mxu0
    %v308 = vadd.f32 %v231, %v307
    %v309 = vpop.f32.mrf.mxu0
    %310 = vmatprep.mubr.bf16.mxu0 0
    %311 = vmatmul.mubr.bf16.gmra.mxu0 %v268
    %v312 = vpop.f32.mrf.mxu0
    %v313 = vadd.f32 %v236, %v312
    %v314 = vpop.f32.mrf.mxu0
    %v315 = vpop.f32.mrf.mxu0
    %v316 = vadd.f32 %v239, %v315
    %v317 = vpop.f32.mrf.mxu0
    %318 = vdwg.mxu0
    %vm323 = vcmask 1046528
    %v324 = vrot.slane %v116, 1
    %v325 = vrot.slane %v118, 1
    %v326 = vsel %vm323, %v324, %v325
    %v327 = vrot.slane %v117, 1
    %v328 = vrot.slane %v119, 1
    %v329 = vsel %vm323, %v327, %v328
    %s330 = scalar_lea.vmem [#allocation5], 64
    %v331 = vld [vmem:[%s330] sm:$0xf]
    %v332 = vld [vmem:[%s330 + $0x4] sm:$0xf]
    %v333 = vld [vmem:[%s330 + $0x8] sm:$0xf]
    %v334 = vld [vmem:[%s330 + $0xc] sm:$0xf]
    %v335 = vld [vmem:[%s330 + $0x10] sm:$0xf]
    %v336 = vld [vmem:[%s330 + $0x14] sm:$0xf]
    %v337 = vld [vmem:[%s330 + $0x18] sm:$0xf]
    %v338 = vld [vmem:[%s330 + $0x1c] sm:$0xf]
    %v347 = vunpack.c.l.b16 %v331
    %v348 = vunpack.c.l.b16 %v332
    %v349 = vunpack.c.l.b16 %v333
    %v350 = vunpack.c.l.b16 %v334
    %v351 = vunpack.c.l.b16 %v335
    %v352 = vunpack.c.l.b16 %v336
    %v353 = vunpack.c.l.b16 %v337
    %v354 = vunpack.c.l.b16 %v338
    %v355 = vpack.c.b16 %v348, %v347
    %v356 = vpack.c.b16 %v350, %v349
    %v357 = vpack.c.b16 %v352, %v351
    %v358 = vpack.c.b16 %v354, %v353
    %v364 = vsel %vm186, %v326, 0
    %v367 = vsel %vm186, %v329, 0
    %369 = vmatprep.subr.bf16.mxu0 0
    %370 = vmatpush1.bf16.msra.mxu0 0
    %371 = vmatprep.subr.bf16.mxu0 0
    %372 = vmatpush1.bf16.msra.mxu0 0
    %373 = vmatprep.subr.bf16.mxu0 0
    %374 = vmatpush1.bf16.msra.mxu0 0
    %375 = vmatprep.subr.bf16.mxu0 0
    %376 = vmatpush1.bf16.msra.mxu0 0
    %377 = vmatprep.subr.bf16.mxu0 0
    %378 = vmatpush1.bf16.msra.mxu0 %v358
    %379 = vmatprep.subr.bf16.mxu0 0
    %380 = vmatpush1.bf16.msra.mxu0 %v357
    %381 = vmatprep.subr.bf16.mxu0 0
    %382 = vmatpush1.bf16.msra.mxu0 %v356
    %383 = vmatprep.subr.bf16.mxu0 0
    %384 = vmatpush1.bf16.msra.mxu0 %v355
    %385 = vmatprep.subr.bf16.mxu0 0
    %386 = vmatpush2.bf16.msra.mxu0 0
    %387 = vmatprep.subr.bf16.mxu0 0
    %388 = vmatpush2.bf16.msra.mxu0 0
    %389 = vmatprep.subr.bf16.mxu0 0
    %390 = vmatpush2.bf16.msra.mxu0 0
    %391 = vmatprep.subr.bf16.mxu0 0
    %392 = vmatpush2.bf16.msra.mxu0 0
    %393 = vmatprep.subr.bf16.mxu0 0
    %394 = vmatpush2.bf16.msra.mxu0 0
    %395 = vmatprep.subr.bf16.mxu0 0
    %396 = vmatpush2.bf16.msra.mxu0 0
    %397 = vmatprep.subr.bf16.mxu0 0
    %398 = vmatpush2.bf16.msra.mxu0 0
    %399 = vmatprep.subr.bf16.mxu0 0
    %400 = vmatpush2.bf16.msra.mxu0 0
    %401 = vmatprep.mubr.bf16.mxu0 0
    %402 = vmatmul.mubr.bf16.gmra.mxu0 %v364
    %v403 = vpop.f32.mrf.mxu0
    %v404 = vadd.f32 0.0, %v403
    %v405 = vpop.f32.mrf.mxu0
    %v406 = vpop.f32.mrf.mxu0
    %v407 = vadd.f32 0.0, %v406
    %v408 = vpop.f32.mrf.mxu0
    %409 = vmatprep.mubr.bf16.mxu0 0
    %410 = vmatmul.mubr.bf16.gmra.mxu0 %v367
    %v411 = vpop.f32.mrf.mxu0
    %v412 = vadd.f32 0.0, %v411
    %v413 = vpop.f32.mrf.mxu0
    %v414 = vpop.f32.mrf.mxu0
    %v415 = vadd.f32 0.0, %v414
    %v416 = vpop.f32.mrf.mxu0
    %417 = vdwg.mxu0
    %v418 = vadd.f32 %v305, %v404
    %v419 = vadd.f32 %v308, %v407
    %v420 = vadd.f32 %v313, %v412
    %v421 = vadd.f32 %v316, %v415
    %v422 = vmax.f32 %v418, 0.0
    %v423 = vmax.f32 %v419, 0.0
    %v424 = vmax.f32 %v420, 0.0
    %v425 = vmax.f32 %v421, 0.0
    %v426 = vpack.c.bf16 %v423, %v422
    %v427 = vpack.c.bf16 %v425, %v424
    %v432 = vunpack.c.l.b16 %v77
    %v433 = vunpack.c.l.b16 %v78
    %v434 = vunpack.c.l.b16 %v79
    %v435 = vunpack.c.l.b16 %v80
    %v436 = vpack.c.b16 %v433, %v432
    %v437 = vpack.c.b16 %v435, %v434
    %v438 = vld [vmem:[#allocation7] sm:$0xf]
    %v439 = vld [vmem:[#allocation7 + $0x4] sm:$0xf]
    %v440 = vld [vmem:[#allocation7 + $0x8] sm:$0xf]
    %v441 = vld [vmem:[#allocation7 + $0xc] sm:$0xf]
    %v442 = vld [vmem:[#allocation7 + $0x10] sm:$0xf]
    %v443 = vld [vmem:[#allocation7 + $0x14] sm:$0xf]
    %v444 = vld [vmem:[#allocation7 + $0x18] sm:$0xf]
    %v445 = vld [vmem:[#allocation7 + $0x1c] sm:$0xf]
    %v446 = vld [vmem:[#allocation7 + $0x20] sm:$0xf]
    %v447 = vld [vmem:[#allocation7 + $0x24] sm:$0xf]
    %v448 = vld [vmem:[#allocation7 + $0x28] sm:$0xf]
    %v449 = vld [vmem:[#allocation7 + $0x2c] sm:$0xf]
    %v450 = vld [vmem:[#allocation7 + $0x30] sm:$0xf]
    %v451 = vld [vmem:[#allocation7 + $0x34] sm:$0xf]
    %v452 = vld [vmem:[#allocation7 + $0x38] sm:$0xf]
    %v453 = vld [vmem:[#allocation7 + $0x3c] sm:$0xf]
    %v454 = vld [vmem:[#allocation7 + $0x40] sm:$0xf]
    %v455 = vld [vmem:[#allocation7 + $0x44] sm:$0xf]
    %v456 = vld [vmem:[#allocation7 + $0x48] sm:$0xf]
    %v457 = vld [vmem:[#allocation7 + $0x4c] sm:$0xf]
    %v458 = vld [vmem:[#allocation7 + $0x50] sm:$0xf]
    %v459 = vld [vmem:[#allocation7 + $0x54] sm:$0xf]
    %v460 = vld [vmem:[#allocation7 + $0x58] sm:$0xf]
    %v461 = vld [vmem:[#allocation7 + $0x5c] sm:$0xf]
    %v463 = vshrl.u32 %v426, 16
    %v465 = vrot.slane %v463, 7
    %v466 = vshll.u32 %v426, 16
    %v468 = vor.u32 %v465, %v466
    %v470 = vshrl.u32 %v427, 16
    %v472 = vrot.slane %v470, 7
    %v473 = vshll.u32 %v427, 16
    %v475 = vor.u32 %v472, %v473
    %v480 = vsel %vm115, 0, %v468
    %v481 = vsel %vm115, 0, %v475
    %v482 = vsel %vm115, %v465, 0
    %v483 = vsel %vm115, %v472, 0
    %v484 = vld [vmem:[#allocation8] sm:$0xf]
    %v485 = vld [vmem:[#allocation8 + $0x4] sm:$0xf]
    %v486 = vld [vmem:[#allocation8 + $0x8] sm:$0xf]
    %v487 = vld [vmem:[#allocation8 + $0xc] sm:$0xf]
    %v488 = vld [vmem:[#allocation8 + $0x10] sm:$0xf]
    %v489 = vld [vmem:[#allocation8 + $0x14] sm:$0xf]
    %v490 = vld [vmem:[#allocation8 + $0x18] sm:$0xf]
    %v491 = vld [vmem:[#allocation8 + $0x1c] sm:$0xf]
    %v492 = vld [vmem:[#allocation8 + $0x20] sm:$0xf]
    %v493 = vld [vmem:[#allocation8 + $0x24] sm:$0xf]
    %v494 = vld [vmem:[#allocation8 + $0x28] sm:$0xf]
    %v495 = vld [vmem:[#allocation8 + $0x2c] sm:$0xf]
    %v496 = vld [vmem:[#allocation8 + $0x30] sm:$0xf]
    %v497 = vld [vmem:[#allocation8 + $0x34] sm:$0xf]
    %v498 = vld [vmem:[#allocation8 + $0x38] sm:$0xf]
    %v499 = vld [vmem:[#allocation8 + $0x3c] sm:$0xf]
    %v516 = vunpack.c.l.b16 %v484
    %v517 = vunpack.c.l.b16 %v485
    %v518 = vunpack.c.l.b16 %v486
    %v519 = vunpack.c.l.b16 %v487
    %v520 = vunpack.c.l.b16 %v488
    %v521 = vunpack.c.l.b16 %v489
    %v522 = vunpack.c.l.b16 %v490
    %v523 = vunpack.c.l.b16 %v491
    %v524 = vunpack.c.l.b16 %v492
    %v525 = vunpack.c.l.b16 %v493
    %v526 = vunpack.c.l.b16 %v494
    %v527 = vunpack.c.l.b16 %v495
    %v528 = vunpack.c.l.b16 %v496
    %v529 = vunpack.c.l.b16 %v497
    %v530 = vunpack.c.l.b16 %v498
    %v531 = vunpack.c.l.b16 %v499
    %v532 = vpack.c.b16 %v517, %v516
    %v533 = vpack.c.b16 %v519, %v518
    %v534 = vpack.c.b16 %v521, %v520
    %v535 = vpack.c.b16 %v523, %v522
    %v536 = vpack.c.b16 %v525, %v524
    %v537 = vpack.c.b16 %v527, %v526
    %v538 = vpack.c.b16 %v529, %v528
    %v539 = vpack.c.b16 %v531, %v530
    %548 = vmatprep.subr.bf16.mxu0 0
    %549 = vmatpush1.bf16.msra.mxu0 %v539
    %550 = vmatprep.subr.bf16.mxu0 0
    %551 = vmatpush1.bf16.msra.mxu0 %v538
    %552 = vmatprep.subr.bf16.mxu0 0
    %553 = vmatpush1.bf16.msra.mxu0 %v537
    %554 = vmatprep.subr.bf16.mxu0 0
    %555 = vmatpush1.bf16.msra.mxu0 %v536
    %556 = vmatprep.subr.bf16.mxu0 0
    %557 = vmatpush1.bf16.msra.mxu0 %v535
    %558 = vmatprep.subr.bf16.mxu0 0
    %559 = vmatpush1.bf16.msra.mxu0 %v534
    %560 = vmatprep.subr.bf16.mxu0 0
    %561 = vmatpush1.bf16.msra.mxu0 %v533
    %562 = vmatprep.subr.bf16.mxu0 0
    %563 = vmatpush1.bf16.msra.mxu0 %v532
    %564 = vmatprep.subr.bf16.mxu0 0
    %565 = vmatpush2.bf16.msra.mxu0 0
    %566 = vmatprep.subr.bf16.mxu0 0
    %567 = vmatpush2.bf16.msra.mxu0 0
    %568 = vmatprep.subr.bf16.mxu0 0
    %569 = vmatpush2.bf16.msra.mxu0 0
    %570 = vmatprep.subr.bf16.mxu0 0
    %571 = vmatpush2.bf16.msra.mxu0 0
    %572 = vmatprep.subr.bf16.mxu0 0
    %573 = vmatpush2.bf16.msra.mxu0 0
    %574 = vmatprep.subr.bf16.mxu0 0
    %575 = vmatpush2.bf16.msra.mxu0 0
    %576 = vmatprep.subr.bf16.mxu0 0
    %577 = vmatpush2.bf16.msra.mxu0 0
    %578 = vmatprep.subr.bf16.mxu0 0
    %579 = vmatpush2.bf16.msra.mxu0 0
    %580 = vmatprep.mubr.bf16.mxu0 0
    %581 = vmatmul.mubr.bf16.gmra.mxu0 %v480
    %v582 = vpop.f32.mrf.mxu0
    %v583 = vadd.f32 0.0, %v582
    %v584 = vpop.f32.mrf.mxu0
    %v585 = vpop.f32.mrf.mxu0
    %v586 = vadd.f32 0.0, %v585
    %v587 = vpop.f32.mrf.mxu0
    %588 = vmatprep.mubr.bf16.mxu0 0
    %589 = vmatmul.mubr.bf16.gmra.mxu0 %v481
    %v590 = vpop.f32.mrf.mxu0
    %v591 = vadd.f32 0.0, %v590
    %v592 = vpop.f32.mrf.mxu0
    %v593 = vpop.f32.mrf.mxu0
    %v594 = vadd.f32 0.0, %v593
    %v595 = vpop.f32.mrf.mxu0
    %596 = vdwg.mxu0
    %v621 = vunpack.c.l.b16 %v438
    %v622 = vunpack.c.l.b16 %v439
    %v623 = vunpack.c.l.b16 %v440
    %v624 = vunpack.c.l.b16 %v441
    %v625 = vunpack.c.l.b16 %v442
    %v626 = vunpack.c.l.b16 %v443
    %v627 = vunpack.c.l.b16 %v444
    %v628 = vunpack.c.l.b16 %v445
    %v629 = vunpack.c.l.b16 %v446
    %v630 = vunpack.c.l.b16 %v447
    %v631 = vunpack.c.l.b16 %v448
    %v632 = vunpack.c.l.b16 %v449
    %v633 = vunpack.c.l.b16 %v450
    %v634 = vunpack.c.l.b16 %v451
    %v635 = vunpack.c.l.b16 %v452
    %v636 = vunpack.c.l.b16 %v453
    %v637 = vunpack.c.l.b16 %v454
    %v638 = vunpack.c.l.b16 %v455
    %v639 = vunpack.c.l.b16 %v456
    %v640 = vunpack.c.l.b16 %v457
    %v641 = vunpack.c.l.b16 %v458
    %v642 = vunpack.c.l.b16 %v459
    %v643 = vunpack.c.l.b16 %v460
    %v644 = vunpack.c.l.b16 %v461
    %v645 = vpack.c.b16 %v622, %v621
    %v646 = vpack.c.b16 %v624, %v623
    %v647 = vpack.c.b16 %v626, %v625
    %v648 = vpack.c.b16 %v628, %v627
    %v649 = vpack.c.b16 %v630, %v629
    %v650 = vpack.c.b16 %v632, %v631
    %v651 = vpack.c.b16 %v634, %v633
    %v652 = vpack.c.b16 %v636, %v635
    %v653 = vpack.c.b16 %v638, %v637
    %v654 = vpack.c.b16 %v640, %v639
    %v655 = vpack.c.b16 %v642, %v641
    %v656 = vpack.c.b16 %v644, %v643
    %v670 = vsel %vm186, %v436, 0
    %v673 = vsel %vm186, %v437, 0
    %675 = vmatprep.subr.bf16.mxu0 0
    %676 = vmatpush1.bf16.msra.mxu0 %v652
    %677 = vmatprep.subr.bf16.mxu0 0
    %678 = vmatpush1.bf16.msra.mxu0 %v651
    %679 = vmatprep.subr.bf16.mxu0 0
    %680 = vmatpush1.bf16.msra.mxu0 %v650
    %681 = vmatprep.subr.bf16.mxu0 0
    %682 = vmatpush1.bf16.msra.mxu0 %v649
    %683 = vmatprep.subr.bf16.mxu0 0
    %684 = vmatpush1.bf16.msra.mxu0 %v648
    %685 = vmatprep.subr.bf16.mxu0 0
    %686 = vmatpush1.bf16.msra.mxu0 %v647
    %687 = vmatprep.subr.bf16.mxu0 0
    %688 = vmatpush1.bf16.msra.mxu0 %v646
    %689 = vmatprep.subr.bf16.mxu0 0
    %690 = vmatpush1.bf16.msra.mxu0 %v645
    %691 = vmatprep.subr.bf16.mxu0 0
    %692 = vmatpush2.bf16.msra.mxu0 0
    %693 = vmatprep.subr.bf16.mxu0 0
    %694 = vmatpush2.bf16.msra.mxu0 0
    %695 = vmatprep.subr.bf16.mxu0 0
    %696 = vmatpush2.bf16.msra.mxu0 0
    %697 = vmatprep.subr.bf16.mxu0 0
    %698 = vmatpush2.bf16.msra.mxu0 0
    %699 = vmatprep.subr.bf16.mxu0 0
    %700 = vmatpush2.bf16.msra.mxu0 %v656
    %701 = vmatprep.subr.bf16.mxu0 0
    %702 = vmatpush2.bf16.msra.mxu0 %v655
    %703 = vmatprep.subr.bf16.mxu0 0
    %704 = vmatpush2.bf16.msra.mxu0 %v654
    %705 = vmatprep.subr.bf16.mxu0 0
    %706 = vmatpush2.bf16.msra.mxu0 %v653
    %707 = vmatprep.mubr.bf16.mxu0 %v670
    %708 = vmatmul.mubr.bf16.gmra.mxu0 %v426
    %v709 = vpop.f32.mrf.mxu0
    %v710 = vadd.f32 %v583, %v709
    %v711 = vpop.f32.mrf.mxu0
    %v712 = vpop.f32.mrf.mxu0
    %v713 = vadd.f32 %v586, %v712
    %v714 = vpop.f32.mrf.mxu0
    %715 = vmatprep.mubr.bf16.mxu0 %v673
    %716 = vmatmul.mubr.bf16.gmra.mxu0 %v427
    %v717 = vpop.f32.mrf.mxu0
    %v718 = vadd.f32 %v591, %v717
    %v719 = vpop.f32.mrf.mxu0
    %v720 = vpop.f32.mrf.mxu0
    %v721 = vadd.f32 %v594, %v720
    %v722 = vpop.f32.mrf.mxu0
    %723 = vdwg.mxu0
    %v728 = vrot.slane %v480, 1
    %v729 = vrot.slane %v482, 1
    %v730 = vsel %vm323, %v728, %v729
    %v731 = vrot.slane %v481, 1
    %v732 = vrot.slane %v483, 1
    %v733 = vsel %vm323, %v731, %v732
    %s736 = scalar_lea.vmem [#allocation8], 64
    %v737 = vld [vmem:[%s736] sm:$0xf]
    %v738 = vld [vmem:[%s736 + $0x4] sm:$0xf]
    %v739 = vld [vmem:[%s736 + $0x8] sm:$0xf]
    %v740 = vld [vmem:[%s736 + $0xc] sm:$0xf]
    %v741 = vld [vmem:[%s736 + $0x10] sm:$0xf]
    %v742 = vld [vmem:[%s736 + $0x14] sm:$0xf]
    %v743 = vld [vmem:[%s736 + $0x18] sm:$0xf]
    %v744 = vld [vmem:[%s736 + $0x1c] sm:$0xf]
    %v745 = vld [vmem:[%s736 + $0x20] sm:$0xf]
    %v746 = vld [vmem:[%s736 + $0x24] sm:$0xf]
    %v747 = vld [vmem:[%s736 + $0x28] sm:$0xf]
    %v748 = vld [vmem:[%s736 + $0x2c] sm:$0xf]
    %v749 = vld [vmem:[%s736 + $0x30] sm:$0xf]
    %v750 = vld [vmem:[%s736 + $0x34] sm:$0xf]
    %v751 = vld [vmem:[%s736 + $0x38] sm:$0xf]
    %v752 = vld [vmem:[%s736 + $0x3c] sm:$0xf]
    %v769 = vunpack.c.l.b16 %v737
    %v770 = vunpack.c.l.b16 %v738
    %v771 = vunpack.c.l.b16 %v739
    %v772 = vunpack.c.l.b16 %v740
    %v773 = vunpack.c.l.b16 %v741
    %v774 = vunpack.c.l.b16 %v742
    %v775 = vunpack.c.l.b16 %v743
    %v776 = vunpack.c.l.b16 %v744
    %v777 = vunpack.c.l.b16 %v745
    %v778 = vunpack.c.l.b16 %v746
    %v779 = vunpack.c.l.b16 %v747
    %v780 = vunpack.c.l.b16 %v748
    %v781 = vunpack.c.l.b16 %v749
    %v782 = vunpack.c.l.b16 %v750
    %v783 = vunpack.c.l.b16 %v751
    %v784 = vunpack.c.l.b16 %v752
    %v785 = vpack.c.b16 %v770, %v769
    %v786 = vpack.c.b16 %v772, %v771
    %v787 = vpack.c.b16 %v774, %v773
    %v788 = vpack.c.b16 %v776, %v775
    %v789 = vpack.c.b16 %v778, %v777
    %v790 = vpack.c.b16 %v780, %v779
    %v791 = vpack.c.b16 %v782, %v781
    %v792 = vpack.c.b16 %v784, %v783
    %801 = vmatprep.subr.bf16.mxu0 0
    %802 = vmatpush1.bf16.msra.mxu0 %v792
    %803 = vmatprep.subr.bf16.mxu0 0
    %804 = vmatpush1.bf16.msra.mxu0 %v791
    %805 = vmatprep.subr.bf16.mxu0 0
    %806 = vmatpush1.bf16.msra.mxu0 %v790
    %807 = vmatprep.subr.bf16.mxu0 0
    %808 = vmatpush1.bf16.msra.mxu0 %v789
    %809 = vmatprep.subr.bf16.mxu0 0
    %810 = vmatpush1.bf16.msra.mxu0 %v788
    %811 = vmatprep.subr.bf16.mxu0 0
    %812 = vmatpush1.bf16.msra.mxu0 %v787
    %813 = vmatprep.subr.bf16.mxu0 0
    %814 = vmatpush1.bf16.msra.mxu0 %v786
    %815 = vmatprep.subr.bf16.mxu0 0
    %816 = vmatpush1.bf16.msra.mxu0 %v785
    %817 = vmatprep.subr.bf16.mxu0 0
    %818 = vmatpush2.bf16.msra.mxu0 0
    %819 = vmatprep.subr.bf16.mxu0 0
    %820 = vmatpush2.bf16.msra.mxu0 0
    %821 = vmatprep.subr.bf16.mxu0 0
    %822 = vmatpush2.bf16.msra.mxu0 0
    %823 = vmatprep.subr.bf16.mxu0 0
    %824 = vmatpush2.bf16.msra.mxu0 0
    %825 = vmatprep.subr.bf16.mxu0 0
    %826 = vmatpush2.bf16.msra.mxu0 0
    %827 = vmatprep.subr.bf16.mxu0 0
    %828 = vmatpush2.bf16.msra.mxu0 0
    %829 = vmatprep.subr.bf16.mxu0 0
    %830 = vmatpush2.bf16.msra.mxu0 0
    %831 = vmatprep.subr.bf16.mxu0 0
    %832 = vmatpush2.bf16.msra.mxu0 0
    %833 = vmatprep.mubr.bf16.mxu0 0
    %834 = vmatmul.mubr.bf16.gmra.mxu0 %v730
    %v835 = vpop.f32.mrf.mxu0
    %v836 = vadd.f32 0.0, %v835
    %v837 = vpop.f32.mrf.mxu0
    %v838 = vpop.f32.mrf.mxu0
    %v839 = vadd.f32 0.0, %v838
    %v840 = vpop.f32.mrf.mxu0
    %841 = vmatprep.mubr.bf16.mxu0 0
    %842 = vmatmul.mubr.bf16.gmra.mxu0 %v733
    %v843 = vpop.f32.mrf.mxu0
    %v844 = vadd.f32 0.0, %v843
    %v845 = vpop.f32.mrf.mxu0
    %v846 = vpop.f32.mrf.mxu0
    %v847 = vadd.f32 0.0, %v846
    %v848 = vpop.f32.mrf.mxu0
    %849 = vdwg.mxu0
    %v850 = vadd.f32 %v710, %v836
    %v851 = vadd.f32 %v713, %v839
    %v852 = vadd.f32 %v718, %v844
    %v853 = vadd.f32 %v721, %v847
    %v854 = vld [vmem:[%s4] sm:$0x1]
    %v856 = vlaneseq
    %v857 = vshrl.u32 %v856, 7
    %v858 = vsub.s32 0, %v857
    %v859 = vrot.slane %v854, %v858
    %v861 = vadd.f32 %v850, %v859
    %v862 = vadd.f32 %v851, %v859
    %v863 = vadd.f32 %v852, %v859
    %v864 = vadd.f32 %v853, %v859
    %865 = vst [vmem:[#allocation10] sm:$0xff] %v861
    %866 = vst [vmem:[#allocation10 + $0x8] sm:$0xff] %v862
    %867 = vst [vmem:[#allocation10 + $0x10] sm:$0xff] %v863
    %868 = vst [vmem:[#allocation10 + $0x18] sm:$0xff] %v864
    // Predicated region
    $region38: #{tpu_custom_call.1} parent=1 // pred_check
      _
    $region39: #{tpu_custom_call.1} parent=1 // pred_check_branch
      %870 = sbr.rel (0) target = $region41
    $region40: #{tpu_custom_call.1} parent=1 // pred_region
      %s872 = ssub.s32 512, 512
      %873 = vsyncadd [#allocation4], %s872
      %s874 = sshll.u32 [#allocation10], 4
      %s875 = int_to_ptr.vmem [resolvable:$true] %s874
      %880 = dma.vmem_to_hbm [thread:$0]  %s875, 512, %s5, [#allocation4], 128, 128, 8
    $region41: #{tpu_custom_call.1} parent=1 // pred_fallthru
      _
    // Predicated region
    $region42: #{tpu_custom_call.1} parent=1 // pred_check
      _
    $region43: #{tpu_custom_call.1} parent=1 // pred_check_branch
      %882 = sbr.rel (0) target = $region45
    $region44: #{tpu_custom_call.1} parent=1 // pred_region
      %883 = dma.done [#allocation4], 512
    $region45: #{tpu_custom_call.1} parent=1 // pred_fallthru
      _
    %884 = vsyncpa [#allocation3], 1
    %885 = vsyncpa [#allocation6], 1
    %886 = vsyncpa [#allocation9], 1
    %887 = vsyncpa [#allocation4], 1

</llo_original>
